<compile_context>
chip_gen: v7x
topology: tpu7x:2x2x1
jax: 0.10.0
libtpu: 0.0.40
codegen_flags: <defaults>
</compile_context>

<pallas_src>
import functools

import jax
import jax.numpy as jnp
from jax.experimental import pallas as pl
from jax.experimental.pallas import tpu as pltpu


def _round_up(x, m):
    return ((x + m - 1) // m) * m


def ffn_kernel(x_ref, w1_ref, b1_ref, w2_ref, b2_ref, o_ref, acc_ref):
    """One (row-tile i, hidden-chunk hk) grid step.

    x_ref : (tm, Dp)  bf16     w1_ref: (Dp, th) bf16    b1_ref: (1, th) f32
    w2_ref: (th, Op)  bf16     b2_ref: (1, Op)  f32
    o_ref : (tm, Op)  out dtype
    acc_ref: (tm, Op) f32 VMEM scratch, persists across the hk axis.
    """
    hk = pl.program_id(1)

    @pl.when(hk == 0)
    def _init():
        acc_ref[...] = jnp.zeros_like(acc_ref)

    # dense1 chunk (MXU, f32 accumulate) + bias + ReLU (VPU).
    h = jnp.dot(x_ref[...], w1_ref[...], preferred_element_type=jnp.float32)
    h = jnp.maximum(h + b1_ref[...], 0.0)

    # dense2 partial product, accumulated over hidden chunks.
    acc_ref[...] += jnp.dot(h.astype(w2_ref.dtype), w2_ref[...],
                            preferred_element_type=jnp.float32)

    @pl.when(hk == pl.num_programs(1) - 1)
    def _finalize():
        o_ref[...] = (acc_ref[...] + b2_ref[...]).astype(o_ref.dtype)


@functools.partial(jax.jit, static_argnames=("tm", "th", "compute_dtype"))
def position_wise_ffn(x, w1, b1, w2, b2, *, tm=256, th=512,
                      compute_dtype=jnp.bfloat16):
    """x: (B, S, D). w1: (D, H), b1: (H,), w2: (H, O), b2: (O,). Returns (B, S, O)."""
    B, S, D = x.shape
    H = w1.shape[1]
    O = w2.shape[1]
    M = B * S
    out_dtype = x.dtype

    # MXU/lane-aligned tile sizes. Sublane granularity 16 covers f32 and bf16;
    # clamp tiles for tiny problems so we don't over-pad, but keep a multi-step
    # grid for realistic transformer sizes.
    tm = _round_up(min(tm, _round_up(M, 16)), 16)
    th = _round_up(min(th, _round_up(H, 128)), 128)

    M_pad = _round_up(M, tm)
    D_pad = _round_up(D, 128)
    H_pad = _round_up(H, th)     # th | H_pad by construction
    O_pad = _round_up(O, 128)

    # Zero-padding is exact: padded x cols / W1 rows contribute 0; padded W1
    # cols get b1=0 -> relu(0)=0 and meet zero W2 rows; padded W2 cols / b2
    # give 0 output columns that are sliced off below.
    x2d = jnp.pad(x.reshape(M, D),
                  ((0, M_pad - M), (0, D_pad - D))).astype(compute_dtype)
    w1p = jnp.pad(w1, ((0, D_pad - D), (0, H_pad - H))).astype(compute_dtype)
    w2p = jnp.pad(w2, ((0, H_pad - H), (0, O_pad - O))).astype(compute_dtype)
    b1p = jnp.pad(b1, (0, H_pad - H)).astype(jnp.float32).reshape(1, H_pad)
    b2p = jnp.pad(b2, (0, O_pad - O)).astype(jnp.float32).reshape(1, O_pad)

    grid = (M_pad // tm, H_pad // th)

    cbytes = jnp.dtype(compute_dtype).itemsize
    cost = pl.CostEstimate(
        flops=2 * M_pad * H_pad * (D_pad + O_pad),
        transcendentals=0,
        bytes_accessed=(M_pad * D_pad + D_pad * H_pad + H_pad * O_pad) * cbytes
                       + M_pad * O_pad * jnp.dtype(out_dtype).itemsize,
    )

    out2d = pl.pallas_call(
        ffn_kernel,
        out_shape=jax.ShapeDtypeStruct((M_pad, O_pad), out_dtype),
        grid_spec=pltpu.PrefetchScalarGridSpec(
            num_scalar_prefetch=0,
            grid=grid,
            in_specs=[
                pl.BlockSpec((tm, D_pad), lambda i, hk: (i, 0)),    # X row tile
                pl.BlockSpec((D_pad, th), lambda i, hk: (0, hk)),   # W1 chunk
                pl.BlockSpec((1, th),     lambda i, hk: (0, hk)),   # b1 chunk
                pl.BlockSpec((th, O_pad), lambda i, hk: (hk, 0)),   # W2 chunk
                pl.BlockSpec((1, O_pad),  lambda i, hk: (0, 0)),    # b2 (tiny)
            ],
            out_specs=pl.BlockSpec((tm, O_pad), lambda i, hk: (i, 0)),
            scratch_shapes=[pltpu.VMEM((tm, O_pad), jnp.float32)],
        ),
        compiler_params=pltpu.CompilerParams(
            dimension_semantics=("parallel", "arbitrary"),
            vmem_limit_bytes=48 * 1024 * 1024,
        ),
        cost_estimate=cost,
    )(x2d, w1p, b1p, w2p, b2p)

    return out2d[:M, :O].reshape(B, S, O)


def init_params(key, d_model, ffn_num_hiddens, ffn_num_outputs, dtype=jnp.float32):
    """nn.LazyLinear-style uniform(-1/sqrt(fan_in), 1/sqrt(fan_in)) init.
    Weights stored transposed: (in_features, out_features)."""
    k1, k2, k3, k4 = jax.random.split(key, 4)
    bound1 = 1.0 / (d_model ** 0.5)
    bound2 = 1.0 / (ffn_num_hiddens ** 0.5)
    w1 = jax.random.uniform(k1, (d_model, ffn_num_hiddens), dtype, -bound1, bound1)
    b1 = jax.random.uniform(k2, (ffn_num_hiddens,), dtype, -bound1, bound1)
    w2 = jax.random.uniform(k3, (ffn_num_hiddens, ffn_num_outputs), dtype, -bound2, bound2)
    b2 = jax.random.uniform(k4, (ffn_num_outputs,), dtype, -bound2, bound2)
    return w1, b1, w2, b2


def _reference(x, w1, b1, w2, b2, compute_dtype=jnp.bfloat16):
    """Plain-JAX FFN matching the kernel's mixed precision (bf16 operands,
    f32 accumulation) so the comparison tolerance can stay tight."""
    f32 = jnp.float32
    xb = x.astype(compute_dtype).astype(f32)
    w1b = w1.astype(compute_dtype).astype(f32)
    w2b = w2.astype(compute_dtype).astype(f32)
    h = jnp.maximum(xb @ w1b + b1.astype(f32), 0.0).astype(compute_dtype).astype(f32)
    return (h @ w2b + b2.astype(f32)).astype(x.dtype)


if __name__ == "__main__":
    key = jax.random.PRNGKey(0)
    kx, kp, kx2, kp2 = jax.random.split(key, 4)

    # 1) Toy config matching the PyTorch module's small usage (LazyLinear infers D).
    B, S, D, H, O = 2, 8, 16, 32, 16
    x = jax.random.normal(kx, (B, S, D), jnp.float32)
    w1, b1, w2, b2 = init_params(kp, D, H, O)
    out = position_wise_ffn(x, w1, b1, w2, b2)
    jax.block_until_ready(out)
    assert out.shape == (B, S, O)
    assert jnp.allclose(out, _reference(x, w1, b1, w2, b2), atol=2e-2, rtol=2e-2)

    # 2) Multi-tile config exercising the (parallel row-tile, arbitrary
    #    hidden-chunk) grid and the f32 accumulator across hidden chunks.
    B2, S2, D2, H2, O2 = 2, 64, 64, 256, 64
    x2 = jax.random.normal(kx2, (B2, S2, D2), jnp.float32)
    p2 = init_params(kp2, D2, H2, O2)
    out2 = position_wise_ffn(x2, *p2, tm=64, th=128)
    jax.block_until_ready(out2)
    assert out2.shape == (B2, S2, O2)
    assert jnp.allclose(out2, _reference(x2, *p2), atol=2e-2, rtol=2e-2)

    print("KERNEL_OK")
</pallas_src>

<mosaic_0001>
module attributes {stable_mosaic.version = 11 : i64} {
  func.func @ffn_kernel(%arg0: i32, %arg1: i32, %arg2: memref<16x128xbf16, #tpu.memory_space<vmem>>, %arg3: memref<128x128xbf16, #tpu.memory_space<vmem>>, %arg4: memref<1x128xf32, #tpu.memory_space<vmem>>, %arg5: memref<128x128xbf16, #tpu.memory_space<vmem>>, %arg6: memref<1x128xf32, #tpu.memory_space<vmem>>, %arg7: memref<16x128xf32, #tpu.memory_space<vmem>>, %arg8: memref<16x128xf32, #tpu.memory_space<vmem>>) attributes {dimension_semantics = [#tpu.dimension_semantics<parallel>, #tpu.dimension_semantics<arbitrary>], iteration_bounds = array<i64: 1, 1>, scalar_prefetch = 0 : i64, scratch_operands = 1 : i64, tpu.core_type = #tpu.core_type<tc>, window_params = [{transform_indices = @transform_0, window_bounds = array<i64: 16, 128>}, {transform_indices = @transform_1, window_bounds = array<i64: 128, 128>}, {transform_indices = @transform_2, window_bounds = array<i64: 1, 128>}, {transform_indices = @transform_3, window_bounds = array<i64: 128, 128>}, {pipeline_mode = #tpu.pipeline_mode<synchronous>, transform_indices = @transform_4, window_bounds = array<i64: 1, 128>}, {transform_indices = @transform_5, window_bounds = array<i64: 16, 128>}]} {
    %c0_i32 = arith.constant 0 : i32
    %0 = arith.cmpi eq, %arg1, %c0_i32 : i32
    %1 = arith.extui %0 : i1 to i32
    %c0_i32_0 = arith.constant 0 : i32
    %2 = arith.cmpi ne, %1, %c0_i32_0 : i32
    scf.if %2 {
      %cst_16 = arith.constant 0.000000e+00 : f32
      %20 = vector.broadcast %cst_16 : f32 to vector<16x128xf32>
      %c0_17 = arith.constant 0 : index
      %c0_18 = arith.constant 0 : index
      %21 = vector.load %arg8[%c0_17, %c0_18] : memref<16x128xf32, #tpu.memory_space<vmem>>, vector<16x128xf32>
      tpu.vector_store %arg8[%c0_17, %c0_18], %20 {strides = array<i32>} : memref<16x128xf32, #tpu.memory_space<vmem>>, vector<16x128xf32>,
    } else {
    }
    %c0 = arith.constant 0 : index
    %c0_1 = arith.constant 0 : index
    %3 = vector.load %arg2[%c0, %c0_1] : memref<16x128xbf16, #tpu.memory_space<vmem>>, vector<16x128xbf16>
    %c0_2 = arith.constant 0 : index
    %c0_3 = arith.constant 0 : index
    %4 = vector.load %arg3[%c0_2, %c0_3] : memref<128x128xbf16, #tpu.memory_space<vmem>>, vector<128x128xbf16>
    %cst = arith.constant dense<0.000000e+00> : vector<16x128xf32>
    %5 = tpu.matmul %3, %4, %cst {dimension_numbers = #tpu.dot_dimension_numbers<[1], [0], [0], [1], [0, 0, 1, 1], [], []>} : vector<16x128xbf16>, vector<128x128xbf16>, vector<16x128xf32> -> vector<16x128xf32>
    %c0_4 = arith.constant 0 : index
    %c0_5 = arith.constant 0 : index
    %6 = vector.load %arg4[%c0_4, %c0_5] : memref<1x128xf32, #tpu.memory_space<vmem>>, vector<1x128xf32>
    %7 = vector.broadcast %6 : vector<1x128xf32> to vector<16x128xf32>
    %8 = arith.addf %5, %7 : vector<16x128xf32>
    %cst_6 = arith.constant 0.000000e+00 : f32
    %9 = vector.broadcast %cst_6 : f32 to vector<16x128xf32>
    %10 = arith.maximumf %8, %9 : vector<16x128xf32>
    %c0_7 = arith.constant 0 : index
    %c0_8 = arith.constant 0 : index
    %11 = vector.load %arg8[%c0_7, %c0_8] : memref<16x128xf32, #tpu.memory_space<vmem>>, vector<16x128xf32>
    %12 = arith.truncf %10 : vector<16x128xf32> to vector<16x128xbf16>
    %c0_9 = arith.constant 0 : index
    %c0_10 = arith.constant 0 : index
    %13 = vector.load %arg5[%c0_9, %c0_10] : memref<128x128xbf16, #tpu.memory_space<vmem>>, vector<128x128xbf16>
    %cst_11 = arith.constant dense<0.000000e+00> : vector<16x128xf32>
    %14 = tpu.matmul %12, %13, %cst_11 {dimension_numbers = #tpu.dot_dimension_numbers<[1], [0], [0], [1], [0, 0, 1, 1], [], []>} : vector<16x128xbf16>, vector<128x128xbf16>, vector<16x128xf32> -> vector<16x128xf32>
    %15 = arith.addf %11, %14 : vector<16x128xf32>
    %c0_12 = arith.constant 0 : index
    %c0_13 = arith.constant 0 : index
    %16 = vector.load %arg8[%c0_12, %c0_13] : memref<16x128xf32, #tpu.memory_space<vmem>>, vector<16x128xf32>
    tpu.vector_store %arg8[%c0_12, %c0_13], %15 {strides = array<i32>} : memref<16x128xf32, #tpu.memory_space<vmem>>, vector<16x128xf32>,
    %c0_i32_14 = arith.constant 0 : i32
    %17 = arith.cmpi eq, %arg1, %c0_i32_14 : i32
    %18 = arith.extui %17 : i1 to i32
    %c0_i32_15 = arith.constant 0 : i32
    %19 = arith.cmpi ne, %18, %c0_i32_15 : i32
    scf.if %19 {
      %c0_16 = arith.constant 0 : index
      %c0_17 = arith.constant 0 : index
      %20 = vector.load %arg8[%c0_16, %c0_17] : memref<16x128xf32, #tpu.memory_space<vmem>>, vector<16x128xf32>
      %c0_18 = arith.constant 0 : index
      %c0_19 = arith.constant 0 : index
      %21 = vector.load %arg6[%c0_18, %c0_19] : memref<1x128xf32, #tpu.memory_space<vmem>>, vector<1x128xf32>
      %22 = vector.broadcast %21 : vector<1x128xf32> to vector<16x128xf32>
      %23 = arith.addf %20, %22 : vector<16x128xf32>
      %c0_20 = arith.constant 0 : index
      %c0_21 = arith.constant 0 : index
      %24 = vector.load %arg7[%c0_20, %c0_21] : memref<16x128xf32, #tpu.memory_space<vmem>>, vector<16x128xf32>
      tpu.vector_store %arg7[%c0_20, %c0_21], %23 {strides = array<i32>} : memref<16x128xf32, #tpu.memory_space<vmem>>, vector<16x128xf32>,
    } else {
    }
    return
  }
  func.func @transform_0(%arg0: i32, %arg1: i32) -> (i32, i32) {
    %c0_i32 = arith.constant 0 : i32
    %c0_i32_0 = arith.constant 0 : i32
    return %arg0, %c0_i32 : i32, i32
  }
  func.func @transform_1(%arg0: i32, %arg1: i32) -> (i32, i32) {
    %c0_i32 = arith.constant 0 : i32
    %c0_i32_0 = arith.constant 0 : i32
    return %c0_i32, %arg1 : i32, i32
  }
  func.func @transform_2(%arg0: i32, %arg1: i32) -> (i32, i32) {
    %c0_i32 = arith.constant 0 : i32
    %c0_i32_0 = arith.constant 0 : i32
    return %c0_i32, %arg1 : i32, i32
  }
  func.func @transform_3(%arg0: i32, %arg1: i32) -> (i32, i32) {
    %c0_i32 = arith.constant 0 : i32
    %c0_i32_0 = arith.constant 0 : i32
    return %arg1, %c0_i32 : i32, i32
  }
  func.func @transform_4(%arg0: i32, %arg1: i32) -> (i32, i32) {
    %c0_i32 = arith.constant 0 : i32
    %c0_i32_0 = arith.constant 0 : i32
    %c0_i32_1 = arith.constant 0 : i32
    return %c0_i32, %c0_i32_0 : i32, i32
  }
  func.func @transform_5(%arg0: i32, %arg1: i32) -> (i32, i32) {
    %c0_i32 = arith.constant 0 : i32
    %c0_i32_0 = arith.constant 0 : i32
    return %arg0, %c0_i32 : i32, i32
  }
}

</mosaic_0001>

<llo_original>
// kernel: position_wise_ffn.1
$region0: #{position_wise_ffn.1}
  #allocation0 [shape = 'u32[]', space=smem, size = 0x4, offset = 0x4, fixed_abs, tag = 'smem constant byte address 0x4 - core index']
  #allocation1 [shape = 'u32[144,128]{1,0:T(1,128)}', space=vmem, size = 0x12000, scoped, tag = 'internal scratch']
  #allocation2 [shape = 'f32[16,128]{1,0:T(8,128)}', space=vmem, size = 0x2000, scoped, tag = 'scratch operand']
  %s0 = inlined_call_operand.vmem [shape: bf16[16,128], index: 0, kind: input, shape index: {}]
  %s1 = inlined_call_operand.vmem [shape: bf16[128,128], index: 1, kind: input, shape index: {}]
  %s2 = inlined_call_operand.vmem [shape: f32[1,128], index: 2, kind: input, shape index: {}]
  %s3 = inlined_call_operand.vmem [shape: bf16[128,128], index: 3, kind: input, shape index: {}]
  %s4 = inlined_call_operand.vmem [shape: f32[1,128], index: 4, kind: input, shape index: {}]
  %s5 = inlined_call_operand.vmem [shape: f32[16,128], index: 5, kind: output, shape index: {}]
  %s6 = sld [smem:[#allocation0]]
  $region38: #{position_wise_ffn.1} parent=0
    _
  %s8 = ssub.s32 1, %s6
  %s9 = scalar_select 0, %s8, %s6
  // Predicated region
  $region2: #{position_wise_ffn.1} parent=0 // pred_check
    _
  $region3: #{position_wise_ffn.1} parent=0 // pred_check_branch
    %11 = sbr.rel (0) target = $region5
  $region4: #{position_wise_ffn.1} parent=0 // pred_region
    _
  $region5: #{position_wise_ffn.1} parent=0 // pred_fallthru
    _
  // Predicated region
  $region6: #{position_wise_ffn.1} parent=0 // pred_check
    _
  $region7: #{position_wise_ffn.1} parent=0 // pred_check_branch
    %13 = sbr.rel (0) target = $region9
  $region8: #{position_wise_ffn.1} parent=0 // pred_region
    _
  $region9: #{position_wise_ffn.1} parent=0 // pred_fallthru
    _
  // Predicated region
  $region10: #{position_wise_ffn.1} parent=0 // pred_check
    _
  $region11: #{position_wise_ffn.1} parent=0 // pred_check_branch
    %15 = sbr.rel (0) target = $region13
  $region12: #{position_wise_ffn.1} parent=0 // pred_region
    _
  $region13: #{position_wise_ffn.1} parent=0 // pred_fallthru
    _
  // Predicated region
  $region14: #{position_wise_ffn.1} parent=0 // pred_check
    _
  $region15: #{position_wise_ffn.1} parent=0 // pred_check_branch
    %17 = sbr.rel (0) target = $region17
  $region16: #{position_wise_ffn.1} parent=0 // pred_region
    _
  $region17: #{position_wise_ffn.1} parent=0 // pred_fallthru
    _
  // Predicated region
  $region18: #{position_wise_ffn.1} parent=0 // pred_check
    _
  $region19: #{position_wise_ffn.1} parent=0 // pred_check_branch
    %19 = sbr.rel (0) target = $region21
  $region20: #{position_wise_ffn.1} parent=0 // pred_region
    _
  $region21: #{position_wise_ffn.1} parent=0 // pred_fallthru
    _
  %p21 = scmp.eq.s32.totalorder 0, 0
  // Predicated region
  $region22: #{position_wise_ffn.1} parent=0 // pred_check
    %p22 = pneg %p21
  $region23: #{position_wise_ffn.1} parent=0 // pred_check_branch
    %24 = sbr.rel (%p22) target = $region25
  $region24: #{position_wise_ffn.1} parent=0 // pred_region
    %25 = vst [vmem:[#allocation2] sm:$0xff] 0.0
    %26 = vst [vmem:[#allocation2 + $0x8] sm:$0xff] 0.0
  $region25: #{position_wise_ffn.1} parent=0 // pred_fallthru
    _
  %v27 = vld [vmem:[%s0] sm:$0xf]
  %v28 = vld [vmem:[%s0 + $0x4] sm:$0xf]
  %v29 = vld [vmem:[%s1] sm:$0xf]
  %v30 = vld [vmem:[%s1 + $0x4] sm:$0xf]
  %v31 = vld [vmem:[%s1 + $0x8] sm:$0xf]
  %v32 = vld [vmem:[%s1 + $0xc] sm:$0xf]
  %v33 = vld [vmem:[%s1 + $0x10] sm:$0xf]
  %v34 = vld [vmem:[%s1 + $0x14] sm:$0xf]
  %v35 = vld [vmem:[%s1 + $0x18] sm:$0xf]
  %v36 = vld [vmem:[%s1 + $0x1c] sm:$0xf]
  %v37 = vld [vmem:[%s1 + $0x20] sm:$0xf]
  %v38 = vld [vmem:[%s1 + $0x24] sm:$0xf]
  %v39 = vld [vmem:[%s1 + $0x28] sm:$0xf]
  %v40 = vld [vmem:[%s1 + $0x2c] sm:$0xf]
  %v41 = vld [vmem:[%s1 + $0x30] sm:$0xf]
  %v42 = vld [vmem:[%s1 + $0x34] sm:$0xf]
  %v43 = vld [vmem:[%s1 + $0x38] sm:$0xf]
  %v44 = vld [vmem:[%s1 + $0x3c] sm:$0xf]
  %v45 = vld [vmem:[%s2] sm:$0x1]
  %v47 = vlaneseq
  %v48 = vshrl.u32 %v47, 7
  %v49 = vsub.s32 0, %v48
  %v50 = vrot.slane %v45, %v49
  %v54 = vunpack.c.l.b16 %v27
  %v55 = vunpack.c.l.b16 %v28
  %v56 = vpack.c.b16 %v55, %v54
  %v74 = vunpack.c.l.b16 %v29
  %v75 = vunpack.c.l.b16 %v30
  %v76 = vunpack.c.l.b16 %v31
  %v77 = vunpack.c.l.b16 %v32
  %v78 = vunpack.c.l.b16 %v33
  %v79 = vunpack.c.l.b16 %v34
  %v80 = vunpack.c.l.b16 %v35
  %v81 = vunpack.c.l.b16 %v36
  %v82 = vunpack.c.l.b16 %v37
  %v83 = vunpack.c.l.b16 %v38
  %v84 = vunpack.c.l.b16 %v39
  %v85 = vunpack.c.l.b16 %v40
  %v86 = vunpack.c.l.b16 %v41
  %v87 = vunpack.c.l.b16 %v42
  %v88 = vunpack.c.l.b16 %v43
  %v89 = vunpack.c.l.b16 %v44
  %v90 = vpack.c.b16 %v75, %v74
  %v91 = vpack.c.b16 %v77, %v76
  %v92 = vpack.c.b16 %v79, %v78
  %v93 = vpack.c.b16 %v81, %v80
  %v94 = vpack.c.b16 %v83, %v82
  %v95 = vpack.c.b16 %v85, %v84
  %v96 = vpack.c.b16 %v87, %v86
  %v97 = vpack.c.b16 %v89, %v88
  %106 = vmatprep.subr.bf16.mxu0 0
  %107 = vmatpush1.bf16.msra.mxu0 %v90
  %108 = vmatprep.subr.bf16.mxu0 0
  %109 = vmatpush1.bf16.msra.mxu0 %v91
  %110 = vmatprep.subr.bf16.mxu0 0
  %111 = vmatpush1.bf16.msra.mxu0 %v92
  %112 = vmatprep.subr.bf16.mxu0 0
  %113 = vmatpush1.bf16.msra.mxu0 %v93
  %114 = vmatprep.subr.bf16.mxu0 0
  %115 = vmatpush1.bf16.msra.mxu0 %v94
  %116 = vmatprep.subr.bf16.mxu0 0
  %117 = vmatpush1.bf16.msra.mxu0 %v95
  %118 = vmatprep.subr.bf16.mxu0 0
  %119 = vmatpush1.bf16.msra.mxu0 %v96
  %120 = vmatprep.subr.bf16.mxu0 0
  %121 = vmatpush1.bf16.msra.mxu0 %v97
  %122 = vmatprep.subr.bf16.mxu0 0
  %123 = vmatpush1.bf16.msra.mxu0 0
  %124 = vmatprep.subr.bf16.mxu0 0
  %125 = vmatpush1.bf16.msra.mxu0 0
  %126 = vmatprep.subr.bf16.mxu0 0
  %127 = vmatpush1.bf16.msra.mxu0 0
  %128 = vmatprep.subr.bf16.mxu0 0
  %129 = vmatpush1.bf16.msra.mxu0 0
  %130 = vmatprep.subr.bf16.mxu0 0
  %131 = vmatpush1.bf16.msra.mxu0 0
  %132 = vmatprep.subr.bf16.mxu0 0
  %133 = vmatpush1.bf16.msra.mxu0 0
  %134 = vmatprep.subr.bf16.mxu0 0
  %135 = vmatpush1.bf16.msra.mxu0 0
  %136 = vmatprep.subr.bf16.mxu0 0
  %137 = vmatpush1.bf16.msra.mxu0 0
  %138 = vmatprep.mubr.bf16.mxu0 0
  %139 = vmatmul.mubr.bf16.gmra.mrb[0].mxu0 %v56
  %v140 = vpop.f32.mrb[0].mxu0
  %v141 = vadd.f32 %v50, %v140
  %v142 = vpop.f32.mrb[0].mxu0
  %v143 = vpop.f32.mrb[0].mxu0
  %v144 = vadd.f32 %v50, %v143
  %v145 = vpop.f32.mrb[0].mxu0
  %146 = vdwg.mxu0
  %v147 = vmax.f32 %v141, 0.0
  %v148 = vmax.f32 %v144, 0.0
  %v149 = vld [vmem:[#allocation2] sm:$0xff]
  %v150 = vld [vmem:[#allocation2 + $0x8] sm:$0xff]
  %v151 = vpack.c.bf16 %v148, %v147
  %v152 = vld [vmem:[%s3] sm:$0xf]
  %v153 = vld [vmem:[%s3 + $0x4] sm:$0xf]
  %v154 = vld [vmem:[%s3 + $0x8] sm:$0xf]
  %v155 = vld [vmem:[%s3 + $0xc] sm:$0xf]
  %v156 = vld [vmem:[%s3 + $0x10] sm:$0xf]
  %v157 = vld [vmem:[%s3 + $0x14] sm:$0xf]
  %v158 = vld [vmem:[%s3 + $0x18] sm:$0xf]
  %v159 = vld [vmem:[%s3 + $0x1c] sm:$0xf]
  %v160 = vld [vmem:[%s3 + $0x20] sm:$0xf]
  %v161 = vld [vmem:[%s3 + $0x24] sm:$0xf]
  %v162 = vld [vmem:[%s3 + $0x28] sm:$0xf]
  %v163 = vld [vmem:[%s3 + $0x2c] sm:$0xf]
  %v164 = vld [vmem:[%s3 + $0x30] sm:$0xf]
  %v165 = vld [vmem:[%s3 + $0x34] sm:$0xf]
  %v166 = vld [vmem:[%s3 + $0x38] sm:$0xf]
  %v167 = vld [vmem:[%s3 + $0x3c] sm:$0xf]
  %v184 = vunpack.c.l.b16 %v152
  %v185 = vunpack.c.l.b16 %v153
  %v186 = vunpack.c.l.b16 %v154
  %v187 = vunpack.c.l.b16 %v155
  %v188 = vunpack.c.l.b16 %v156
  %v189 = vunpack.c.l.b16 %v157
  %v190 = vunpack.c.l.b16 %v158
  %v191 = vunpack.c.l.b16 %v159
  %v192 = vunpack.c.l.b16 %v160
  %v193 = vunpack.c.l.b16 %v161
  %v194 = vunpack.c.l.b16 %v162
  %v195 = vunpack.c.l.b16 %v163
  %v196 = vunpack.c.l.b16 %v164
  %v197 = vunpack.c.l.b16 %v165
  %v198 = vunpack.c.l.b16 %v166
  %v199 = vunpack.c.l.b16 %v167
  %v200 = vpack.c.b16 %v185, %v184
  %v201 = vpack.c.b16 %v187, %v186
  %v202 = vpack.c.b16 %v189, %v188
  %v203 = vpack.c.b16 %v191, %v190
  %v204 = vpack.c.b16 %v193, %v192
  %v205 = vpack.c.b16 %v195, %v194
  %v206 = vpack.c.b16 %v197, %v196
  %v207 = vpack.c.b16 %v199, %v198
  %216 = vmatprep.subr.bf16.mxu0 0
  %217 = vmatpush1.bf16.msra.mxu0 %v200
  %218 = vmatprep.subr.bf16.mxu0 0
  %219 = vmatpush1.bf16.msra.mxu0 %v201
  %220 = vmatprep.subr.bf16.mxu0 0
  %221 = vmatpush1.bf16.msra.mxu0 %v202
  %222 = vmatprep.subr.bf16.mxu0 0
  %223 = vmatpush1.bf16.msra.mxu0 %v203
  %224 = vmatprep.subr.bf16.mxu0 0
  %225 = vmatpush1.bf16.msra.mxu0 %v204
  %226 = vmatprep.subr.bf16.mxu0 0
  %227 = vmatpush1.bf16.msra.mxu0 %v205
  %228 = vmatprep.subr.bf16.mxu0 0
  %229 = vmatpush1.bf16.msra.mxu0 %v206
  %230 = vmatprep.subr.bf16.mxu0 0
  %231 = vmatpush1.bf16.msra.mxu0 %v207
  %232 = vmatprep.subr.bf16.mxu0 0
  %233 = vmatpush1.bf16.msra.mxu0 0
  %234 = vmatprep.subr.bf16.mxu0 0
  %235 = vmatpush1.bf16.msra.mxu0 0
  %236 = vmatprep.subr.bf16.mxu0 0
  %237 = vmatpush1.bf16.msra.mxu0 0
  %238 = vmatprep.subr.bf16.mxu0 0
  %239 = vmatpush1.bf16.msra.mxu0 0
  %240 = vmatprep.subr.bf16.mxu0 0
  %241 = vmatpush1.bf16.msra.mxu0 0
  %242 = vmatprep.subr.bf16.mxu0 0
  %243 = vmatpush1.bf16.msra.mxu0 0
  %244 = vmatprep.subr.bf16.mxu0 0
  %245 = vmatpush1.bf16.msra.mxu0 0
  %246 = vmatprep.subr.bf16.mxu0 0
  %247 = vmatpush1.bf16.msra.mxu0 0
  %248 = vmatprep.mubr.bf16.mxu0 0
  %249 = vmatmul.mubr.bf16.gmra.mrb[0].mxu0 %v151
  %v250 = vpop.f32.mrb[0].mxu0
  %v251 = vadd.f32 0.0, %v250
  %v252 = vpop.f32.mrb[0].mxu0
  %v253 = vpop.f32.mrb[0].mxu0
  %v254 = vadd.f32 0.0, %v253
  %v255 = vpop.f32.mrb[0].mxu0
  %256 = vdwg.mxu0
  %v257 = vadd.f32 %v149, %v251
  %v258 = vadd.f32 %v150, %v254
  %259 = vst [vmem:[#allocation2] sm:$0xff] %v257
  %260 = vst [vmem:[#allocation2 + $0x8] sm:$0xff] %v258
  // Predicated region
  $region26: #{position_wise_ffn.1} parent=0 // pred_check
    %p261 = pneg %p21
  $region27: #{position_wise_ffn.1} parent=0 // pred_check_branch
    %263 = sbr.rel (%p261) target = $region29
  $region28: #{position_wise_ffn.1} parent=0 // pred_region
    %v264 = vld [vmem:[#allocation2] sm:$0xff]
    %v265 = vld [vmem:[#allocation2 + $0x8] sm:$0xff]
    %v266 = vld [vmem:[%s4] sm:$0x1]
    %v268 = vlaneseq
    %v269 = vshrl.u32 %v268, 7
    %v270 = vsub.s32 0, %v269
    %v271 = vrot.slane %v266, %v270
    %v273 = vadd.f32 %v264, %v271
    %v274 = vadd.f32 %v265, %v271
    %275 = vst [vmem:[%s5] sm:$0xff] %v273
    %276 = vst [vmem:[%s5 + $0x8] sm:$0xff] %v274
  $region29: #{position_wise_ffn.1} parent=0 // pred_fallthru
    _
  // Predicated region
  $region30: #{position_wise_ffn.1} parent=0 // pred_check
    _
  $region31: #{position_wise_ffn.1} parent=0 // pred_check_branch
    %278 = sbr.rel (0) target = $region33
  $region32: #{position_wise_ffn.1} parent=0 // pred_region
    _
  $region33: #{position_wise_ffn.1} parent=0 // pred_fallthru
    _
  // Predicated region
  $region34: #{position_wise_ffn.1} parent=0 // pred_check
    _
  $region35: #{position_wise_ffn.1} parent=0 // pred_check_branch
    %280 = sbr.rel (0) target = $region37
  $region36: #{position_wise_ffn.1} parent=0 // pred_region
    _
  $region37: #{position_wise_ffn.1} parent=0 // pred_fallthru
    _

</llo_original>
